<compile_context>
chip_gen: v6e
topology: v6e:2x2x1
jax: 0.10.0
libtpu: 0.0.40
codegen_flags: <defaults>
</compile_context>

<pallas_src>
import math

import jax
import jax.numpy as jnp
from jax import lax
from jax.experimental import pallas as pl
from jax.experimental.pallas import tpu as pltpu

# ----------------------------- problem sizes -------------------------------
NAGENTS = 3          # number of agents (len(sa_sizes))
SDIM = 12            # state dim per agent
ADIM = 4             # action dim per agent (= critic output dim)
IDIM = SDIM + ADIM   # encoder input dim
HIDDEN = 32          # hidden_dim
HEADS = 2            # attend_heads
ATT_DIM = HIDDEN // HEADS
BN_EPS = 1e-5        # nn.BatchNorm1d default eps
LEAK = 0.01          # nn.LeakyReLU default negative_slope

# ----------------------------- fused layouts --------------------------------
LANES = 128
SA_IN = NAGENTS * IDIM                     # 48 (agent-blocked lanes)
S_IN = NAGENTS * SDIM                      # 36
S_IN_P = ((S_IN + 7) // 8) * 8             # 40 (pad so rows stay 8-aligned)
HEAD_BLK = NAGENTS * ATT_DIM               # 48 lanes per head (agent-blocked)
Q_OUT = NAGENTS * ADIM                     # 12
MAX_TILE_B = 128                           # batch tile (sublane/M dimension)

# Packed weight buffer row offsets (all sublane-aligned multiples of 8).
R_ENC = 0                                  # (48, 128)  block-diag encoder fc1
R_SENC = R_ENC + SA_IN                     # (40, 128)  block-diag state-encoder fc1
R_KD = R_SENC + S_IN_P                     # (128,128)  key DIFF (kB - kA), permuted
R_VA = R_KD + LANES                        # (128,128)  value of 1st "other" agent
R_VB = R_VA + LANES                        # (128,128)  value of 2nd "other" agent
R_SEL = R_VB + LANES                       # (128,128)  selector extractor
R_CW1A = R_SEL + LANES                     # (128,128)  critic fc1, s_enc part
R_CW1B = R_CW1A + LANES                    # (128,128)  critic fc1, other-values part
R_CW2 = R_CW1B + LANES                     # (128,128)  critic fc2 (out lanes 12: zero)
R_ONES = R_CW2 + LANES                     # (128,128)  block-ones segment-sum matrix
R_BIAS = R_ONES + LANES                    # (8, 128)   enc_b, senc_b, val_b, cb1, cb2
W_ROWS = R_BIAS + 8                        # 1120 rows total (~573 KB f32)

# "other agent" order: agent i attends over j != i in increasing j (same order
# as the PyTorch loop).
OTHER_A = tuple(sorted(set(range(NAGENTS)) - {i})[0] for i in range(NAGENTS))
OTHER_B = tuple(sorted(set(range(NAGENTS)) - {i})[1] for i in range(NAGENTS))


# ----------------------------- shared math ---------------------------------
def _leaky(x):
    # LeakyReLU as mul+max (cheaper on the VPU than cmp+select).
    return jnp.maximum(x, LEAK * x)


def _round_up(n, m):
    return ((n + m - 1) // m) * m


# ------------------------------- kernel -------------------------------------
def attention_critic_kernel(sa_ref, s_ref, stats_ref, w_ref, out_ref):
    f32 = jnp.float32
    inv_sqrt_d = 1.0 / math.sqrt(ATT_DIM)

    # --- BatchNorm (whole-batch stats precomputed in the wrapper) -----------
    sa = (sa_ref[...] - stats_ref[0:1, :SA_IN]) * stats_ref[1:2, :SA_IN]    # (T, 48)
    s = (s_ref[...] - stats_ref[2:3, :S_IN_P]) * stats_ref[3:4, :S_IN_P]    # (T, 40)

    # --- fused encoders (block-diagonal weights, weights sliced at call site)
    sa_enc = _leaky(jnp.dot(sa, w_ref[R_ENC:R_ENC + SA_IN, :],
                            preferred_element_type=f32)
                    + w_ref[R_BIAS + 0:R_BIAS + 1, :])                      # (T, 128)
    s_enc = _leaky(jnp.dot(s, w_ref[R_SENC:R_SENC + S_IN_P, :],
                           preferred_element_type=f32)
                   + w_ref[R_BIAS + 1:R_BIAS + 2, :])                       # (T, 128)

    # --- attention: permutations + key-diff baked into the packed weights ---
    # lanes are head-major, agent-blocked (16 lanes per (head, agent) segment)
    kd = jnp.dot(sa_enc, w_ref[R_KD:R_KD + LANES, :],
                 preferred_element_type=f32)                                # kB - kA
    va = _leaky(jnp.dot(sa_enc, w_ref[R_VA:R_VA + LANES, :],
                        preferred_element_type=f32)
                + w_ref[R_BIAS + 2:R_BIAS + 3, :])                          # value of 1st other
    vb = _leaky(jnp.dot(sa_enc, w_ref[R_VB:R_VB + LANES, :],
                        preferred_element_type=f32)
                + w_ref[R_BIAS + 2:R_BIAS + 3, :])                          # value of 2nd other
    sel = jnp.dot(s_enc, w_ref[R_SEL:R_SEL + LANES, :],
                  preferred_element_type=f32)

    # per-(head,agent) logit difference, segment-summed AND lane-broadcast via
    # one matmul against a constant block-of-ones matrix (MXU, not XLU).
    ld = jnp.dot(sel * kd, w_ref[R_ONES:R_ONES + LANES, :],
                 preferred_element_type=f32)                                # lB - lA (bcast)
    # softmax over 2 "other" agents == sigmoid of the scaled difference (exact)
    w_a = 1.0 / (1.0 + jnp.exp(ld * inv_sqrt_d))
    ov = vb + w_a * (va - vb)                                               # (T, 128)

    # --- fused per-agent critic MLP (no lane concat: split fc1 weights) -----
    h1 = _leaky(jnp.dot(s_enc, w_ref[R_CW1A:R_CW1A + LANES, :],
                        preferred_element_type=f32)
                + jnp.dot(ov, w_ref[R_CW1B:R_CW1B + LANES, :],
                          preferred_element_type=f32)
                + w_ref[R_BIAS + 3:R_BIAS + 4, :])
    # lane-dense 128-wide store: lanes [0:12] hold all agents' Q values.
    out_ref[...] = (jnp.dot(h1, w_ref[R_CW2:R_CW2 + LANES, :],
                            preferred_element_type=f32)
                    + w_ref[R_BIAS + 4:R_BIAS + 5, :])


# ------------------------- host-side weight packing --------------------------
def pack_params(p):
    """One-time host-side packing of all weights/biases into one (1120, 128)
    f32 buffer with block-diagonal, permutation-baked structure."""
    W = jnp.zeros((W_ROWS, LANES), jnp.float32)
    for i in range(NAGENTS):
        # encoders: agent i's input rows -> agent i's hidden lanes
        W = W.at[R_ENC + i * IDIM:R_ENC + (i + 1) * IDIM,
                 i * HIDDEN:(i + 1) * HIDDEN].set(p["enc_w"][i])
        W = W.at[R_SENC + i * SDIM:R_SENC + (i + 1) * SDIM,
                 i * HIDDEN:(i + 1) * HIDDEN].set(p["senc_w"][i])
        ja, jb = OTHER_A[i], OTHER_B[i]
        for h in range(HEADS):
            c0 = h * HEAD_BLK + i * ATT_DIM
            # key DIFF: k(second other) - k(first other), pre-permuted into
            # agent i's attention lane segment.
            W = W.at[R_KD + jb * HIDDEN:R_KD + (jb + 1) * HIDDEN,
                     c0:c0 + ATT_DIM].add(p["key_w"][h])
            W = W.at[R_KD + ja * HIDDEN:R_KD + (ja + 1) * HIDDEN,
                     c0:c0 + ATT_DIM].add(-p["key_w"][h])
            # permuted value extractors (LeakyReLU is elementwise, so applying
            # it after the permuted matmul is exact).
            W = W.at[R_VA + ja * HIDDEN:R_VA + (ja + 1) * HIDDEN,
                     c0:c0 + ATT_DIM].set(p["val_w"][h])
            W = W.at[R_VB + jb * HIDDEN:R_VB + (jb + 1) * HIDDEN,
                     c0:c0 + ATT_DIM].set(p["val_w"][h])
            # selector for agent i
            W = W.at[R_SEL + i * HIDDEN:R_SEL + (i + 1) * HIDDEN,
                     c0:c0 + ATT_DIM].set(p["sel_w"][h])
            # critic fc1: rows consuming this head's other-values
            W = W.at[R_CW1B + c0:R_CW1B + c0 + ATT_DIM,
                     i * HIDDEN:(i + 1) * HIDDEN].set(
                p["cw1"][i][HIDDEN + h * ATT_DIM:HIDDEN + (h + 1) * ATT_DIM])
            # block-ones segment-sum / broadcast matrix
            W = W.at[R_ONES + c0:R_ONES + c0 + ATT_DIM,
                     c0:c0 + ATT_DIM].set(jnp.ones((ATT_DIM, ATT_DIM), jnp.float32))
            # value bias (same lane layout for vA and vB)
            W = W.at[R_BIAS + 2, c0:c0 + ATT_DIM].set(p["val_b"][h, 0])
        # critic fc1 (s_enc part) and fc2
        W = W.at[R_CW1A + i * HIDDEN:R_CW1A + (i + 1) * HIDDEN,
                 i * HIDDEN:(i + 1) * HIDDEN].set(p["cw1"][i][:HIDDEN])
        W = W.at[R_CW2 + i * HIDDEN:R_CW2 + (i + 1) * HIDDEN,
                 i * ADIM:(i + 1) * ADIM].set(p["cw2"][i])
        # remaining biases
        W = W.at[R_BIAS + 0, i * HIDDEN:(i + 1) * HIDDEN].set(p["enc_b"][i, 0])
        W = W.at[R_BIAS + 1, i * HIDDEN:(i + 1) * HIDDEN].set(p["senc_b"][i, 0])
        W = W.at[R_BIAS + 3, i * HIDDEN:(i + 1) * HIDDEN].set(p["cb1"][i, 0])
        W = W.at[R_BIAS + 4, i * ADIM:(i + 1) * ADIM].set(p["cb2"][i, 0])
    return W


# ------------------------------ wrapper --------------------------------------
@jax.jit
def attention_critic_forward(states, actions, w_packed):
    """states: (N, B, SDIM), actions: (N, B, ADIM), w_packed: (W_ROWS, 128)."""
    B = states.shape[1]
    sa_in = jnp.concatenate([states, actions], axis=2)                  # (N, B, IDIM)
    sa_cat = sa_in.transpose(1, 0, 2).reshape(B, SA_IN)                 # (B, 48)
    s_cat = states.transpose(1, 0, 2).reshape(B, S_IN)                  # (B, 36)

    # Whole-batch BatchNorm1d (training mode, biased variance) statistics,
    # computed once so batch tiles inside the grid remain independent.
    sa_mean = jnp.mean(sa_cat, axis=0)
    sa_inv = lax.rsqrt(jnp.mean((sa_cat - sa_mean) ** 2, axis=0) + BN_EPS)
    s_mean = jnp.mean(s_cat, axis=0)
    s_inv = lax.rsqrt(jnp.mean((s_cat - s_mean) ** 2, axis=0) + BN_EPS)
    stats = jnp.zeros((8, LANES), jnp.float32)
    stats = stats.at[0, :SA_IN].set(sa_mean)
    stats = stats.at[1, :SA_IN].set(sa_inv)
    stats = stats.at[2, :S_IN].set(s_mean)
    stats = stats.at[3, :S_IN].set(s_inv)

    # batch tiling
    tile_b = min(_round_up(B, 8), MAX_TILE_B)
    b_pad = _round_up(B, tile_b)
    sa_pad = jnp.pad(sa_cat, ((0, b_pad - B), (0, 0)))
    s_pad = jnp.pad(s_cat, ((0, b_pad - B), (0, S_IN_P - S_IN)))

    out = pl.pallas_call(
        attention_critic_kernel,
        out_shape=jax.ShapeDtypeStruct((b_pad, LANES), jnp.float32),
        grid=(b_pad // tile_b,),
        in_specs=[
            pl.BlockSpec((tile_b, SA_IN), lambda i: (i, 0)),
            pl.BlockSpec((tile_b, S_IN_P), lambda i: (i, 0)),
            pl.BlockSpec((8, LANES), lambda i: (0, 0)),        # constant: stays resident
            pl.BlockSpec((W_ROWS, LANES), lambda i: (0, 0)),   # constant: stays resident
        ],
        out_specs=pl.BlockSpec((tile_b, LANES), lambda i: (i, 0)),
        compiler_params=pltpu.CompilerParams(
            dimension_semantics=("parallel",)),                # shards across v7x's 2 TCs
    )(sa_pad, s_pad, stats, w_packed)

    all_q = out[:B, :Q_OUT].reshape(B, NAGENTS, ADIM).transpose(1, 0, 2)   # (N, B, ADIM)
    # tiny per-row gather of the chosen action's Q (first argmax), done here.
    idx = jnp.argmax(actions, axis=2)                                      # (N, B)
    q = jnp.take_along_axis(all_q, idx[..., None], axis=2)                 # (N, B, 1)
    return q, all_q


# --------------------- plain-JAX reference (original math) -------------------
def _reference_forward(sa, s, acts, p):
    f32 = jnp.float32

    def bn(x):
        mean = jnp.mean(x, axis=0, keepdims=True)
        var = jnp.mean((x - mean) ** 2, axis=0, keepdims=True)
        return (x - mean) * lax.rsqrt(var + BN_EPS)

    sa_enc = [_leaky(jnp.dot(bn(sa[i]), p["enc_w"][i], preferred_element_type=f32)
                     + p["enc_b"][i]) for i in range(NAGENTS)]
    s_enc = [_leaky(jnp.dot(bn(s[i]), p["senc_w"][i], preferred_element_type=f32)
                    + p["senc_b"][i]) for i in range(NAGENTS)]

    keys = [[jnp.dot(sa_enc[j], p["key_w"][h], preferred_element_type=f32)
             for j in range(NAGENTS)] for h in range(HEADS)]
    vals = [[_leaky(jnp.dot(sa_enc[j], p["val_w"][h], preferred_element_type=f32)
                    + p["val_b"][h]) for j in range(NAGENTS)] for h in range(HEADS)]
    sels = [[jnp.dot(s_enc[i], p["sel_w"][h], preferred_element_type=f32)
             for i in range(NAGENTS)] for h in range(HEADS)]

    inv_sqrt_d = 1.0 / math.sqrt(ATT_DIM)
    other_vals = [[] for _ in range(NAGENTS)]
    for h in range(HEADS):
        for i in range(NAGENTS):
            sel = sels[h][i]
            ks = [keys[h][j] for j in range(NAGENTS) if j != i]
            vs = [vals[h][j] for j in range(NAGENTS) if j != i]
            logits = jnp.concatenate(
                [jnp.sum(sel * k, axis=1, keepdims=True) for k in ks], axis=1)
            scaled = logits * inv_sqrt_d
            e = jnp.exp(scaled - jnp.max(scaled, axis=1, keepdims=True))
            w = e / jnp.sum(e, axis=1, keepdims=True)
            ov = vs[0] * w[:, 0:1]
            for j in range(1, len(vs)):
                ov = ov + vs[j] * w[:, j:j + 1]
            other_vals[i].append(ov)

    q_list, allq_list = [], []
    for i in range(NAGENTS):
        critic_in = jnp.concatenate([s_enc[i]] + other_vals[i], axis=1)
        h1 = _leaky(jnp.dot(critic_in, p["cw1"][i], preferred_element_type=f32)
                    + p["cb1"][i])
        all_q = jnp.dot(h1, p["cw2"][i], preferred_element_type=f32) + p["cb2"][i]
        a = acts[i]
        amax = jnp.max(a, axis=1, keepdims=True)
        col = lax.broadcasted_iota(jnp.int32, a.shape, 1)
        idx = jnp.min(jnp.where(a == amax, col, ADIM), axis=1, keepdims=True)
        q = jnp.sum(jnp.where(col == idx, all_q, 0.0), axis=1, keepdims=True)
        q_list.append(q)
        allq_list.append(all_q)
    return q_list, allq_list


# ----------------------------- param init -----------------------------------
def init_params(key):
    ks = jax.random.split(key, 12)

    def u(k, shape, fan_in):
        bound = 1.0 / math.sqrt(fan_in)
        return jax.random.uniform(k, shape, jnp.float32, -bound, bound)

    return dict(
        enc_w=u(ks[0], (NAGENTS, IDIM, HIDDEN), IDIM),
        enc_b=u(ks[1], (NAGENTS, 1, HIDDEN), IDIM),
        senc_w=u(ks[2], (NAGENTS, SDIM, HIDDEN), SDIM),
        senc_b=u(ks[3], (NAGENTS, 1, HIDDEN), SDIM),
        key_w=u(ks[4], (HEADS, HIDDEN, ATT_DIM), HIDDEN),      # no bias
        sel_w=u(ks[5], (HEADS, HIDDEN, ATT_DIM), HIDDEN),      # no bias
        val_w=u(ks[6], (HEADS, HIDDEN, ATT_DIM), HIDDEN),
        val_b=u(ks[7], (HEADS, 1, ATT_DIM), HIDDEN),
        cw1=u(ks[8], (NAGENTS, 2 * HIDDEN, HIDDEN), 2 * HIDDEN),
        cb1=u(ks[9], (NAGENTS, 1, HIDDEN), 2 * HIDDEN),
        cw2=u(ks[10], (NAGENTS, HIDDEN, ADIM), HIDDEN),
        cb2=u(ks[11], (NAGENTS, 1, ADIM), HIDDEN),
    )


# -------------------------------- main ---------------------------------------
if __name__ == "__main__":
    root = jax.random.PRNGKey(0)
    k_par, k_s, k_a, k_s2, k_a2 = jax.random.split(root, 5)

    params = init_params(k_par)
    w_packed = pack_params(params)                        # one-time host transform

    # ---- small-shape run (batch 8, grid = 1) + correctness check ------------
    B = 8
    states = jax.random.normal(k_s, (NAGENTS, B, SDIM), jnp.float32)
    actions = jax.random.normal(k_a, (NAGENTS, B, ADIM), jnp.float32)
    q, all_q = attention_critic_forward(states, actions, w_packed)
    q = jax.block_until_ready(q)
    all_q = jax.block_until_ready(all_q)

    with jax.default_matmul_precision("float32"):
        q_ref_l, allq_ref_l = _reference_forward(
            jnp.concatenate([states, actions], axis=2), states, actions, params)
    q_ref = jnp.stack(q_ref_l)
    allq_ref = jnp.stack(allq_ref_l)
    assert q.shape == (NAGENTS, B, 1) and all_q.shape == (NAGENTS, B, ADIM)
    assert jnp.allclose(q, q_ref, atol=5e-3, rtol=5e-3)
    assert jnp.allclose(all_q, allq_ref, atol=5e-3, rtol=5e-3)

    # ---- larger batch: exercises the batch-tile grid (2 steps of 128 rows)
    # with the weight buffer VMEM-resident across steps ------------------------
    BIG = 256
    states2 = jax.random.normal(k_s2, (NAGENTS, BIG, SDIM), jnp.float32)
    actions2 = jax.random.normal(k_a2, (NAGENTS, BIG, ADIM), jnp.float32)
    q2, all_q2 = attention_critic_forward(states2, actions2, w_packed)
    q2 = jax.block_until_ready(q2)
    with jax.default_matmul_precision("float32"):
        q2_ref_l, allq2_ref_l = _reference_forward(
            jnp.concatenate([states2, actions2], axis=2), states2, actions2, params)
    assert jnp.allclose(q2, jnp.stack(q2_ref_l), atol=5e-3, rtol=5e-3)
    assert jnp.allclose(all_q2, jnp.stack(allq2_ref_l), atol=5e-3, rtol=5e-3)

    # TODO(synk): regularization / attention-entropy / return_attend / logger
    # outputs (optional return paths) are not produced by the kernel; BatchNorm
    # eval-mode running statistics are not implemented (training-mode batch
    # stats only, computed in the wrapper so batch tiles stay independent).
    print("KERNEL_OK")
</pallas_src>

<mosaic_0001>
module attributes {stable_mosaic.version = 11 : i64} {
  func.func @attention_critic_kernel(%arg0: i32, %arg1: memref<8x48xf32, #tpu.memory_space<vmem>>, %arg2: memref<8x40xf32, #tpu.memory_space<vmem>>, %arg3: memref<8x128xf32, #tpu.memory_space<vmem>>, %arg4: memref<1120x128xf32, #tpu.memory_space<vmem>>, %arg5: memref<8x128xf32, #tpu.memory_space<vmem>>) attributes {dimension_semantics = [#tpu.dimension_semantics<parallel>], iteration_bounds = array<i64: 1>, scalar_prefetch = 0 : i64, scratch_operands = 0 : i64, tpu.core_type = #tpu.core_type<tc>, window_params = [{transform_indices = @transform_0, window_bounds = array<i64: 8, 48>}, {transform_indices = @transform_1, window_bounds = array<i64: 8, 40>}, {pipeline_mode = #tpu.pipeline_mode<synchronous>, transform_indices = @transform_2, window_bounds = array<i64: 8, 128>}, {pipeline_mode = #tpu.pipeline_mode<synchronous>, transform_indices = @transform_3, window_bounds = array<i64: 1120, 128>}, {transform_indices = @transform_4, window_bounds = array<i64: 8, 128>}]} {
    %c0 = arith.constant 0 : index
    %c0_0 = arith.constant 0 : index
    %0 = vector.load %arg1[%c0, %c0_0] : memref<8x48xf32, #tpu.memory_space<vmem>>, vector<8x48xf32>
    %c0_1 = arith.constant 0 : index
    %c0_2 = arith.constant 0 : index
    %1 = vector.load %arg3[%c0_1, %c0_2] : memref<8x128xf32, #tpu.memory_space<vmem>>, vector<1x48xf32>
    %2 = vector.broadcast %1 : vector<1x48xf32> to vector<8x48xf32>
    %3 = arith.subf %0, %2 : vector<8x48xf32>
    %c1 = arith.constant 1 : index
    %c0_3 = arith.constant 0 : index
    %4 = vector.load %arg3[%c1, %c0_3] : memref<8x128xf32, #tpu.memory_space<vmem>>, vector<1x48xf32>
    %5 = vector.broadcast %4 : vector<1x48xf32> to vector<8x48xf32>
    %6 = arith.mulf %3, %5 : vector<8x48xf32>
    %c0_4 = arith.constant 0 : index
    %c0_5 = arith.constant 0 : index
    %7 = vector.load %arg2[%c0_4, %c0_5] : memref<8x40xf32, #tpu.memory_space<vmem>>, vector<8x40xf32>
    %c2 = arith.constant 2 : index
    %c0_6 = arith.constant 0 : index
    %8 = vector.load %arg3[%c2, %c0_6] : memref<8x128xf32, #tpu.memory_space<vmem>>, vector<1x40xf32>
    %9 = vector.broadcast %8 : vector<1x40xf32> to vector<8x40xf32>
    %10 = arith.subf %7, %9 : vector<8x40xf32>
    %c3 = arith.constant 3 : index
    %c0_7 = arith.constant 0 : index
    %11 = vector.load %arg3[%c3, %c0_7] : memref<8x128xf32, #tpu.memory_space<vmem>>, vector<1x40xf32>
    %12 = vector.broadcast %11 : vector<1x40xf32> to vector<8x40xf32>
    %13 = arith.mulf %10, %12 : vector<8x40xf32>
    %c0_8 = arith.constant 0 : index
    %c0_9 = arith.constant 0 : index
    %14 = vector.load %arg4[%c0_8, %c0_9] : memref<1120x128xf32, #tpu.memory_space<vmem>>, vector<48x128xf32>
    %cst = arith.constant dense<0.000000e+00> : vector<8x128xf32>
    %15 = tpu.matmul %6, %14, %cst {dimension_numbers = #tpu.dot_dimension_numbers<[1], [0], [0], [1], [0, 0, 1, 1], [], []>} : vector<8x48xf32>, vector<48x128xf32>, vector<8x128xf32> -> vector<8x128xf32>
    %c1112 = arith.constant 1112 : index
    %c0_10 = arith.constant 0 : index
    %16 = vector.load %arg4[%c1112, %c0_10] : memref<1120x128xf32, #tpu.memory_space<vmem>>, vector<1x128xf32>
    %17 = vector.broadcast %16 : vector<1x128xf32> to vector<8x128xf32>
    %18 = arith.addf %15, %17 : vector<8x128xf32>
    %cst_11 = arith.constant 0.00999999977 : f32
    %19 = vector.broadcast %cst_11 : f32 to vector<8x128xf32>
    %20 = arith.mulf %19, %18 : vector<8x128xf32>
    %21 = arith.maximumf %18, %20 : vector<8x128xf32>
    %c48 = arith.constant 48 : index
    %c0_12 = arith.constant 0 : index
    %22 = vector.load %arg4[%c48, %c0_12] : memref<1120x128xf32, #tpu.memory_space<vmem>>, vector<40x128xf32>
    %cst_13 = arith.constant dense<0.000000e+00> : vector<8x128xf32>
    %23 = tpu.matmul %13, %22, %cst_13 {dimension_numbers = #tpu.dot_dimension_numbers<[1], [0], [0], [1], [0, 0, 1, 1], [], []>} : vector<8x40xf32>, vector<40x128xf32>, vector<8x128xf32> -> vector<8x128xf32>
    %c1113 = arith.constant 1113 : index
    %c0_14 = arith.constant 0 : index
    %24 = vector.load %arg4[%c1113, %c0_14] : memref<1120x128xf32, #tpu.memory_space<vmem>>, vector<1x128xf32>
    %25 = vector.broadcast %24 : vector<1x128xf32> to vector<8x128xf32>
    %26 = arith.addf %23, %25 : vector<8x128xf32>
    %cst_15 = arith.constant 0.00999999977 : f32
    %27 = vector.broadcast %cst_15 : f32 to vector<8x128xf32>
    %28 = arith.mulf %27, %26 : vector<8x128xf32>
    %29 = arith.maximumf %26, %28 : vector<8x128xf32>
    %c88 = arith.constant 88 : index
    %c0_16 = arith.constant 0 : index
    %30 = vector.load %arg4[%c88, %c0_16] : memref<1120x128xf32, #tpu.memory_space<vmem>>, vector<128x128xf32>
    %cst_17 = arith.constant dense<0.000000e+00> : vector<8x128xf32>
    %31 = tpu.matmul %21, %30, %cst_17 {dimension_numbers = #tpu.dot_dimension_numbers<[1], [0], [0], [1], [0, 0, 1, 1], [], []>} : vector<8x128xf32>, vector<128x128xf32>, vector<8x128xf32> -> vector<8x128xf32>
    %c216 = arith.constant 216 : index
    %c0_18 = arith.constant 0 : index
    %32 = vector.load %arg4[%c216, %c0_18] : memref<1120x128xf32, #tpu.memory_space<vmem>>, vector<128x128xf32>
    %cst_19 = arith.constant dense<0.000000e+00> : vector<8x128xf32>
    %33 = tpu.matmul %21, %32, %cst_19 {dimension_numbers = #tpu.dot_dimension_numbers<[1], [0], [0], [1], [0, 0, 1, 1], [], []>} : vector<8x128xf32>, vector<128x128xf32>, vector<8x128xf32> -> vector<8x128xf32>
    %c1114 = arith.constant 1114 : index
    %c0_20 = arith.constant 0 : index
    %34 = vector.load %arg4[%c1114, %c0_20] : memref<1120x128xf32, #tpu.memory_space<vmem>>, vector<1x128xf32>
    %35 = vector.broadcast %34 : vector<1x128xf32> to vector<8x128xf32>
    %36 = arith.addf %33, %35 : vector<8x128xf32>
    %cst_21 = arith.constant 0.00999999977 : f32
    %37 = vector.broadcast %cst_21 : f32 to vector<8x128xf32>
    %38 = arith.mulf %37, %36 : vector<8x128xf32>
    %39 = arith.maximumf %36, %38 : vector<8x128xf32>
    %c344 = arith.constant 344 : index
    %c0_22 = arith.constant 0 : index
    %40 = vector.load %arg4[%c344, %c0_22] : memref<1120x128xf32, #tpu.memory_space<vmem>>, vector<128x128xf32>
    %cst_23 = arith.constant dense<0.000000e+00> : vector<8x128xf32>
    %41 = tpu.matmul %21, %40, %cst_23 {dimension_numbers = #tpu.dot_dimension_numbers<[1], [0], [0], [1], [0, 0, 1, 1], [], []>} : vector<8x128xf32>, vector<128x128xf32>, vector<8x128xf32> -> vector<8x128xf32>
    %c1114_24 = arith.constant 1114 : index
    %c0_25 = arith.constant 0 : index
    %42 = vector.load %arg4[%c1114_24, %c0_25] : memref<1120x128xf32, #tpu.memory_space<vmem>>, vector<1x128xf32>
    %43 = vector.broadcast %42 : vector<1x128xf32> to vector<8x128xf32>
    %44 = arith.addf %41, %43 : vector<8x128xf32>
    %cst_26 = arith.constant 0.00999999977 : f32
    %45 = vector.broadcast %cst_26 : f32 to vector<8x128xf32>
    %46 = arith.mulf %45, %44 : vector<8x128xf32>
    %47 = arith.maximumf %44, %46 : vector<8x128xf32>
    %c472 = arith.constant 472 : index
    %c0_27 = arith.constant 0 : index
    %48 = vector.load %arg4[%c472, %c0_27] : memref<1120x128xf32, #tpu.memory_space<vmem>>, vector<128x128xf32>
    %cst_28 = arith.constant dense<0.000000e+00> : vector<8x128xf32>
    %49 = tpu.matmul %29, %48, %cst_28 {dimension_numbers = #tpu.dot_dimension_numbers<[1], [0], [0], [1], [0, 0, 1, 1], [], []>} : vector<8x128xf32>, vector<128x128xf32>, vector<8x128xf32> -> vector<8x128xf32>
    %50 = arith.mulf %49, %31 : vector<8x128xf32>
    %c984 = arith.constant 984 : index
    %c0_29 = arith.constant 0 : index
    %51 = vector.load %arg4[%c984, %c0_29] : memref<1120x128xf32, #tpu.memory_space<vmem>>, vector<128x128xf32>
    %cst_30 = arith.constant dense<0.000000e+00> : vector<8x128xf32>
    %52 = tpu.matmul %50, %51, %cst_30 {dimension_numbers = #tpu.dot_dimension_numbers<[1], [0], [0], [1], [0, 0, 1, 1], [], []>} : vector<8x128xf32>, vector<128x128xf32>, vector<8x128xf32> -> vector<8x128xf32>
    %cst_31 = arith.constant 2.500000e-01 : f32
    %53 = vector.broadcast %cst_31 : f32 to vector<8x128xf32>
    %54 = arith.mulf %52, %53 : vector<8x128xf32>
    %55 = math.exp %54 : vector<8x128xf32>
    %cst_32 = arith.constant 1.000000e+00 : f32
    %56 = vector.broadcast %cst_32 : f32 to vector<8x128xf32>
    %57 = arith.addf %56, %55 : vector<8x128xf32>
    %cst_33 = arith.constant 1.000000e+00 : f32
    %58 = vector.broadcast %cst_33 : f32 to vector<8x128xf32>
    %59 = arith.divf %58, %57 : vector<8x128xf32>
    %60 = arith.subf %39, %47 : vector<8x128xf32>
    %61 = arith.mulf %59, %60 : vector<8x128xf32>
    %62 = arith.addf %47, %61 : vector<8x128xf32>
    %c600 = arith.constant 600 : index
    %c0_34 = arith.constant 0 : index
    %63 = vector.load %arg4[%c600, %c0_34] : memref<1120x128xf32, #tpu.memory_space<vmem>>, vector<128x128xf32>
    %cst_35 = arith.constant dense<0.000000e+00> : vector<8x128xf32>
    %64 = tpu.matmul %29, %63, %cst_35 {dimension_numbers = #tpu.dot_dimension_numbers<[1], [0], [0], [1], [0, 0, 1, 1], [], []>} : vector<8x128xf32>, vector<128x128xf32>, vector<8x128xf32> -> vector<8x128xf32>
    %c728 = arith.constant 728 : index
    %c0_36 = arith.constant 0 : index
    %65 = vector.load %arg4[%c728, %c0_36] : memref<1120x128xf32, #tpu.memory_space<vmem>>, vector<128x128xf32>
    %cst_37 = arith.constant dense<0.000000e+00> : vector<8x128xf32>
    %66 = tpu.matmul %62, %65, %cst_37 {dimension_numbers = #tpu.dot_dimension_numbers<[1], [0], [0], [1], [0, 0, 1, 1], [], []>} : vector<8x128xf32>, vector<128x128xf32>, vector<8x128xf32> -> vector<8x128xf32>
    %67 = arith.addf %64, %66 : vector<8x128xf32>
    %c1115 = arith.constant 1115 : index
    %c0_38 = arith.constant 0 : index
    %68 = vector.load %arg4[%c1115, %c0_38] : memref<1120x128xf32, #tpu.memory_space<vmem>>, vector<1x128xf32>
    %69 = vector.broadcast %68 : vector<1x128xf32> to vector<8x128xf32>
    %70 = arith.addf %67, %69 : vector<8x128xf32>
    %cst_39 = arith.constant 0.00999999977 : f32
    %71 = vector.broadcast %cst_39 : f32 to vector<8x128xf32>
    %72 = arith.mulf %71, %70 : vector<8x128xf32>
    %73 = arith.maximumf %70, %72 : vector<8x128xf32>
    %c856 = arith.constant 856 : index
    %c0_40 = arith.constant 0 : index
    %74 = vector.load %arg4[%c856, %c0_40] : memref<1120x128xf32, #tpu.memory_space<vmem>>, vector<128x128xf32>
    %cst_41 = arith.constant dense<0.000000e+00> : vector<8x128xf32>
    %75 = tpu.matmul %73, %74, %cst_41 {dimension_numbers = #tpu.dot_dimension_numbers<[1], [0], [0], [1], [0, 0, 1, 1], [], []>} : vector<8x128xf32>, vector<128x128xf32>, vector<8x128xf32> -> vector<8x128xf32>
    %c1116 = arith.constant 1116 : index
    %c0_42 = arith.constant 0 : index
    %76 = vector.load %arg4[%c1116, %c0_42] : memref<1120x128xf32, #tpu.memory_space<vmem>>, vector<1x128xf32>
    %77 = vector.broadcast %76 : vector<1x128xf32> to vector<8x128xf32>
    %78 = arith.addf %75, %77 : vector<8x128xf32>
    %c0_43 = arith.constant 0 : index
    %c0_44 = arith.constant 0 : index
    %79 = vector.load %arg5[%c0_43, %c0_44] : memref<8x128xf32, #tpu.memory_space<vmem>>, vector<8x128xf32>
    tpu.vector_store %arg5[%c0_43, %c0_44], %78 {strides = array<i32>} : memref<8x128xf32, #tpu.memory_space<vmem>>, vector<8x128xf32>,
    return
  }
  func.func @transform_0(%arg0: i32) -> (i32, i32) {
    %c0_i32 = arith.constant 0 : i32
    %c0_i32_0 = arith.constant 0 : i32
    return %arg0, %c0_i32 : i32, i32
  }
  func.func @transform_1(%arg0: i32) -> (i32, i32) {
    %c0_i32 = arith.constant 0 : i32
    %c0_i32_0 = arith.constant 0 : i32
    return %arg0, %c0_i32 : i32, i32
  }
  func.func @transform_2(%arg0: i32) -> (i32, i32) {
    %c0_i32 = arith.constant 0 : i32
    %c0_i32_0 = arith.constant 0 : i32
    %c0_i32_1 = arith.constant 0 : i32
    return %c0_i32, %c0_i32_0 : i32, i32
  }
  func.func @transform_3(%arg0: i32) -> (i32, i32) {
    %c0_i32 = arith.constant 0 : i32
    %c0_i32_0 = arith.constant 0 : i32
    %c0_i32_1 = arith.constant 0 : i32
    return %c0_i32, %c0_i32_0 : i32, i32
  }
  func.func @transform_4(%arg0: i32) -> (i32, i32) {
    %c0_i32 = arith.constant 0 : i32
    %c0_i32_0 = arith.constant 0 : i32
    return %arg0, %c0_i32 : i32, i32
  }
}

</mosaic_0001>

<llo_original>
// kernel: attention_critic_forward.1
$region0: #{attention_critic_forward.1}
  #allocation0 [shape = 'u32[]', space=smem, size = 0x4, offset = 0x4, fixed_abs, tag = 'smem constant byte address 0x4 - core index']
  #allocation1 [shape = 'u32[144,128]{1,0:T(1,128)}', space=vmem, size = 0x12000, scoped, tag = 'internal scratch']
  %s0 = inlined_call_operand.vmem [shape: f32[8,48], index: 0, kind: input, shape index: {}]
  %s1 = inlined_call_operand.vmem [shape: f32[8,40], index: 1, kind: input, shape index: {}]
  %s2 = inlined_call_operand.vmem [shape: f32[8,128], index: 2, kind: input, shape index: {}]
  %s3 = inlined_call_operand.hbm [shape: f32[1120,128], index: 3, kind: input, shape index: {}]
  %s4 = inlined_call_operand.vmem [shape: f32[8,128], index: 4, kind: output, shape index: {}]
  %s5 = sld [smem:[#allocation0]]
  $region30: #{attention_critic_forward.1} parent=0
    _
  %s7 = ssub.s32 1, %s5
  %s8 = scalar_select 0, %s7, %s5
  $region1: #{attention_critic_forward.1} parent=0
    #allocation2 [shape = 'u8[573440]{0}', space=vmem, size = 0x8c000, scoped, tag = 'input window, operand 3, single buffered']
    #allocation3 [shape = 's32[1]{0}', space=sflag, size = 0x4, scoped, tag = 'scoped memory for attention_critic_forward.1']
    %9 = vsyncpa [#allocation3], 0
    // Predicated region
    $region2: #{attention_critic_forward.1} parent=1 // pred_check
      _
    $region3: #{attention_critic_forward.1} parent=1 // pred_check_branch
      %11 = sbr.rel (0) target = $region5
    $region4: #{attention_critic_forward.1} parent=1 // pred_region
      _
    $region5: #{attention_critic_forward.1} parent=1 // pred_fallthru
      _
    // Predicated region
    $region6: #{attention_critic_forward.1} parent=1 // pred_check
      _
    $region7: #{attention_critic_forward.1} parent=1 // pred_check_branch
      %13 = sbr.rel (0) target = $region9
    $region8: #{attention_critic_forward.1} parent=1 // pred_region
      _
    $region9: #{attention_critic_forward.1} parent=1 // pred_fallthru
      _
    // Predicated region
    $region10: #{attention_critic_forward.1} parent=1 // pred_check
      _
    $region11: #{attention_critic_forward.1} parent=1 // pred_check_branch
      %15 = sbr.rel (0) target = $region13
    $region12: #{attention_critic_forward.1} parent=1 // pred_region
      _
    $region13: #{attention_critic_forward.1} parent=1 // pred_fallthru
      _
    // Predicated region
    $region14: #{attention_critic_forward.1} parent=1 // pred_check
      _
    $region15: #{attention_critic_forward.1} parent=1 // pred_check_branch
      %17 = sbr.rel (0) target = $region17
    $region16: #{attention_critic_forward.1} parent=1 // pred_region
      %s19 = ssub.s32 17920, 17920
      %20 = vsyncadd [#allocation3], %s19
      %s21 = sshll.u32 [#allocation2], 4
      %s22 = int_to_ptr.vmem [resolvable:$true] %s21
      %27 = dma.hbm_to_vmem [thread:$0]  %s3, 17920, %s22, [#allocation3], 128, 128, 8
    $region17: #{attention_critic_forward.1} parent=1 // pred_fallthru
      _
    // Predicated region
    $region18: #{attention_critic_forward.1} parent=1 // pred_check
      _
    $region19: #{attention_critic_forward.1} parent=1 // pred_check_branch
      %29 = sbr.rel (0) target = $region21
    $region20: #{attention_critic_forward.1} parent=1 // pred_region
      %30 = dma.done [#allocation3], 17920
    $region21: #{attention_critic_forward.1} parent=1 // pred_fallthru
      _
    %v31 = vld [vmem:[%s0] sm:$0xff]
    %v32 = vld [vmem:[%s2] sm:$0x1]
    %v33 = vlaneseq
    %v34 = vshrl.u32 %v33, 7
    %v35 = vsub.s32 0, %v34
    %v36 = vrot.slane %v32, %v35
    %v37 = vsub.f32 %v31, %v36
    %v38 = vld [vmem:[%s2 + $0x1] sm:$0x1]
    %v39 = vlaneseq
    %v40 = vshrl.u32 %v39, 7
    %v41 = vsub.s32 0, %v40
    %v42 = vrot.slane %v38, %v41
    %v43 = vmul.f32 %v37, %v42
    %v44 = vld [vmem:[%s1] sm:$0xff]
    %v45 = vld [vmem:[%s2 + $0x2] sm:$0x1]
    %v46 = vlaneseq
    %v47 = vshrl.u32 %v46, 7
    %v48 = vsub.s32 0, %v47
    %v49 = vrot.slane %v45, %v48
    %v50 = vsub.f32 %v44, %v49
    %v51 = vld [vmem:[%s2 + $0x3] sm:$0x1]
    %v52 = vlaneseq
    %v53 = vshrl.u32 %v52, 7
    %v54 = vsub.s32 0, %v53
    %v55 = vrot.slane %v51, %v54
    %v56 = vmul.f32 %v50, %v55
    %v57 = vld [vmem:[#allocation2] sm:$0xff]
    %v58 = vld [vmem:[#allocation2 + $0x8] sm:$0xff]
    %v59 = vld [vmem:[#allocation2 + $0x10] sm:$0xff]
    %v60 = vld [vmem:[#allocation2 + $0x18] sm:$0xff]
    %v61 = vld [vmem:[#allocation2 + $0x20] sm:$0xff]
    %v62 = vld [vmem:[#allocation2 + $0x28] sm:$0xff]
    %v63 = vld [vmem:[#allocation2 + $0x458] sm:$0x1]
    %v64 = vlaneseq
    %v65 = vshrl.u32 %v64, 7
    %v66 = vsub.s32 0, %v65
    %v67 = vrot.slane %v63, %v66
    %vm68 = vcmask 392192
    %v70 = vsel %vm68, %v43, 0
    %72 = vmatprep.subr.mxu0 0.0
    %73 = vmatpush1.msra.mxu0 0.0
    %74 = vmatprep.subr.mxu0 0.0
    %75 = vmatpush1.msra.mxu0 0.0
    %76 = vmatprep.subr.mxu0 0.0
    %77 = vmatpush1.msra.mxu0 0.0
    %78 = vmatprep.subr.mxu0 0.0
    %79 = vmatpush1.msra.mxu0 0.0
    %80 = vmatprep.subr.mxu0 0.0
    %81 = vmatpush1.msra.mxu0 0.0
    %82 = vmatprep.subr.mxu0 0.0
    %83 = vmatpush1.msra.mxu0 0.0
    %84 = vmatprep.subr.mxu0 0.0
    %85 = vmatpush1.msra.mxu0 0.0
    %86 = vmatprep.subr.mxu0 0.0
    %87 = vmatpush1.msra.mxu0 0.0
    %88 = vmatprep.subr.mxu0 0.0
    %89 = vmatpush1.msra.mxu0 0.0
    %90 = vmatprep.subr.mxu0 0.0
    %91 = vmatpush1.msra.mxu0 0.0
    %92 = vmatprep.subr.mxu0 0.0
    %93 = vmatpush1.msra.mxu0 %v62
    %94 = vmatprep.subr.mxu0 0.0
    %95 = vmatpush1.msra.mxu0 %v61
    %96 = vmatprep.subr.mxu0 0.0
    %97 = vmatpush1.msra.mxu0 %v60
    %98 = vmatprep.subr.mxu0 0.0
    %99 = vmatpush1.msra.mxu0 %v59
    %100 = vmatprep.subr.mxu0 0.0
    %101 = vmatpush1.msra.mxu0 %v58
    %102 = vmatprep.subr.mxu0 0.0
    %103 = vmatpush1.msra.mxu0 %v57
    %104 = vmatprep.subr.mxu0 0.0
    %105 = vmatpush2.msra.mxu0 0.0
    %106 = vmatprep.subr.mxu0 0.0
    %107 = vmatpush2.msra.mxu0 0.0
    %108 = vmatprep.subr.mxu0 0.0
    %109 = vmatpush2.msra.mxu0 0.0
    %110 = vmatprep.subr.mxu0 0.0
    %111 = vmatpush2.msra.mxu0 0.0
    %112 = vmatprep.subr.mxu0 0.0
    %113 = vmatpush2.msra.mxu0 0.0
    %114 = vmatprep.subr.mxu0 0.0
    %115 = vmatpush2.msra.mxu0 0.0
    %116 = vmatprep.subr.mxu0 0.0
    %117 = vmatpush2.msra.mxu0 0.0
    %118 = vmatprep.subr.mxu0 0.0
    %119 = vmatpush2.msra.mxu0 0.0
    %120 = vmatprep.subr.mxu0 0.0
    %121 = vmatpush2.msra.mxu0 0.0
    %122 = vmatprep.subr.mxu0 0.0
    %123 = vmatpush2.msra.mxu0 0.0
    %124 = vmatprep.subr.mxu0 0.0
    %125 = vmatpush2.msra.mxu0 0.0
    %126 = vmatprep.subr.mxu0 0.0
    %127 = vmatpush2.msra.mxu0 0.0
    %128 = vmatprep.subr.mxu0 0.0
    %129 = vmatpush2.msra.mxu0 0.0
    %130 = vmatprep.subr.mxu0 0.0
    %131 = vmatpush2.msra.mxu0 0.0
    %132 = vmatprep.subr.mxu0 0.0
    %133 = vmatpush2.msra.mxu0 0.0
    %134 = vmatprep.subr.mxu0 0.0
    %135 = vmatpush2.msra.mxu0 0.0
    %136 = vmatprep.mubr.f32.mxu0 0.0
    %137 = vmatmul.mubr.f32.gmra.mxu0 %v70
    %v138 = vpop.f32.mrf.mxu0
    %v139 = vadd.f32 %v67, %v138
    %v140 = vpop.f32.mrf.mxu0
    %141 = vdwg.mxu0
    %v142 = vmul.f32 %v139, 0.01
    %v143 = vmax.f32 %v139, %v142
    %v144 = vld [vmem:[#allocation2 + $0x30] sm:$0xff]
    %v145 = vld [vmem:[#allocation2 + $0x38] sm:$0xff]
    %v146 = vld [vmem:[#allocation2 + $0x40] sm:$0xff]
    %v147 = vld [vmem:[#allocation2 + $0x48] sm:$0xff]
    %v148 = vld [vmem:[#allocation2 + $0x50] sm:$0xff]
    %v149 = vld [vmem:[#allocation2 + $0x459] sm:$0x1]
    %v150 = vlaneseq
    %v151 = vshrl.u32 %v150, 7
    %v152 = vsub.s32 0, %v151
    %v153 = vrot.slane %v149, %v152
    %vm154 = vcmask 326656
    %v156 = vsel %vm154, %v56, 0
    %158 = vmatprep.subr.mxu0 0.0
    %159 = vmatpush1.msra.mxu0 0.0
    %160 = vmatprep.subr.mxu0 0.0
    %161 = vmatpush1.msra.mxu0 0.0
    %162 = vmatprep.subr.mxu0 0.0
    %163 = vmatpush1.msra.mxu0 0.0
    %164 = vmatprep.subr.mxu0 0.0
    %165 = vmatpush1.msra.mxu0 0.0
    %166 = vmatprep.subr.mxu0 0.0
    %167 = vmatpush1.msra.mxu0 0.0
    %168 = vmatprep.subr.mxu0 0.0
    %169 = vmatpush1.msra.mxu0 0.0
    %170 = vmatprep.subr.mxu0 0.0
    %171 = vmatpush1.msra.mxu0 0.0
    %172 = vmatprep.subr.mxu0 0.0
    %173 = vmatpush1.msra.mxu0 0.0
    %174 = vmatprep.subr.mxu0 0.0
    %175 = vmatpush1.msra.mxu0 0.0
    %176 = vmatprep.subr.mxu0 0.0
    %177 = vmatpush1.msra.mxu0 0.0
    %178 = vmatprep.subr.mxu0 0.0
    %179 = vmatpush1.msra.mxu0 0.0
    %180 = vmatprep.subr.mxu0 0.0
    %181 = vmatpush1.msra.mxu0 %v148
    %182 = vmatprep.subr.mxu0 0.0
    %183 = vmatpush1.msra.mxu0 %v147
    %184 = vmatprep.subr.mxu0 0.0
    %185 = vmatpush1.msra.mxu0 %v146
    %186 = vmatprep.subr.mxu0 0.0
    %187 = vmatpush1.msra.mxu0 %v145
    %188 = vmatprep.subr.mxu0 0.0
    %189 = vmatpush1.msra.mxu0 %v144
    %190 = vmatprep.subr.mxu0 0.0
    %191 = vmatpush2.msra.mxu0 0.0
    %192 = vmatprep.subr.mxu0 0.0
    %193 = vmatpush2.msra.mxu0 0.0
    %194 = vmatprep.subr.mxu0 0.0
    %195 = vmatpush2.msra.mxu0 0.0
    %196 = vmatprep.subr.mxu0 0.0
    %197 = vmatpush2.msra.mxu0 0.0
    %198 = vmatprep.subr.mxu0 0.0
    %199 = vmatpush2.msra.mxu0 0.0
    %200 = vmatprep.subr.mxu0 0.0
    %201 = vmatpush2.msra.mxu0 0.0
    %202 = vmatprep.subr.mxu0 0.0
    %203 = vmatpush2.msra.mxu0 0.0
    %204 = vmatprep.subr.mxu0 0.0
    %205 = vmatpush2.msra.mxu0 0.0
    %206 = vmatprep.subr.mxu0 0.0
    %207 = vmatpush2.msra.mxu0 0.0
    %208 = vmatprep.subr.mxu0 0.0
    %209 = vmatpush2.msra.mxu0 0.0
    %210 = vmatprep.subr.mxu0 0.0
    %211 = vmatpush2.msra.mxu0 0.0
    %212 = vmatprep.subr.mxu0 0.0
    %213 = vmatpush2.msra.mxu0 0.0
    %214 = vmatprep.subr.mxu0 0.0
    %215 = vmatpush2.msra.mxu0 0.0
    %216 = vmatprep.subr.mxu0 0.0
    %217 = vmatpush2.msra.mxu0 0.0
    %218 = vmatprep.subr.mxu0 0.0
    %219 = vmatpush2.msra.mxu0 0.0
    %220 = vmatprep.subr.mxu0 0.0
    %221 = vmatpush2.msra.mxu0 0.0
    %222 = vmatprep.mubr.f32.mxu0 0.0
    %223 = vmatmul.mubr.f32.gmra.mxu0 %v156
    %v224 = vpop.f32.mrf.mxu0
    %v225 = vadd.f32 %v153, %v224
    %v226 = vpop.f32.mrf.mxu0
    %227 = vdwg.mxu0
    %v228 = vmul.f32 %v225, 0.01
    %v229 = vmax.f32 %v225, %v228
    %v230 = vld [vmem:[#allocation2 + $0x58] sm:$0xff]
    %v231 = vld [vmem:[#allocation2 + $0x60] sm:$0xff]
    %v232 = vld [vmem:[#allocation2 + $0x68] sm:$0xff]
    %v233 = vld [vmem:[#allocation2 + $0x70] sm:$0xff]
    %v234 = vld [vmem:[#allocation2 + $0x78] sm:$0xff]
    %v235 = vld [vmem:[#allocation2 + $0x80] sm:$0xff]
    %v236 = vld [vmem:[#allocation2 + $0x88] sm:$0xff]
    %v237 = vld [vmem:[#allocation2 + $0x90] sm:$0xff]
    %v238 = vld [vmem:[#allocation2 + $0x98] sm:$0xff]
    %v239 = vld [vmem:[#allocation2 + $0xa0] sm:$0xff]
    %v240 = vld [vmem:[#allocation2 + $0xa8] sm:$0xff]
    %v241 = vld [vmem:[#allocation2 + $0xb0] sm:$0xff]
    %v242 = vld [vmem:[#allocation2 + $0xb8] sm:$0xff]
    %v243 = vld [vmem:[#allocation2 + $0xc0] sm:$0xff]
    %v244 = vld [vmem:[#allocation2 + $0xc8] sm:$0xff]
    %v245 = vld [vmem:[#allocation2 + $0xd0] sm:$0xff]
    %246 = vmatprep.subr.mxu0 0.0
    %247 = vmatpush1.msra.mxu0 %v245
    %248 = vmatprep.subr.mxu0 0.0
    %249 = vmatpush1.msra.mxu0 %v244
    %250 = vmatprep.subr.mxu0 0.0
    %251 = vmatpush1.msra.mxu0 %v243
    %252 = vmatprep.subr.mxu0 0.0
    %253 = vmatpush1.msra.mxu0 %v242
    %254 = vmatprep.subr.mxu0 0.0
    %255 = vmatpush1.msra.mxu0 %v241
    %256 = vmatprep.subr.mxu0 0.0
    %257 = vmatpush1.msra.mxu0 %v240
    %258 = vmatprep.subr.mxu0 0.0
    %259 = vmatpush1.msra.mxu0 %v239
    %260 = vmatprep.subr.mxu0 0.0
    %261 = vmatpush1.msra.mxu0 %v238
    %262 = vmatprep.subr.mxu0 0.0
    %263 = vmatpush1.msra.mxu0 %v237
    %264 = vmatprep.subr.mxu0 0.0
    %265 = vmatpush1.msra.mxu0 %v236
    %266 = vmatprep.subr.mxu0 0.0
    %267 = vmatpush1.msra.mxu0 %v235
    %268 = vmatprep.subr.mxu0 0.0
    %269 = vmatpush1.msra.mxu0 %v234
    %270 = vmatprep.subr.mxu0 0.0
    %271 = vmatpush1.msra.mxu0 %v233
    %272 = vmatprep.subr.mxu0 0.0
    %273 = vmatpush1.msra.mxu0 %v232
    %274 = vmatprep.subr.mxu0 0.0
    %275 = vmatpush1.msra.mxu0 %v231
    %276 = vmatprep.subr.mxu0 0.0
    %277 = vmatpush1.msra.mxu0 %v230
    %278 = vmatprep.subr.mxu0 0.0
    %279 = vmatpush2.msra.mxu0 0.0
    %280 = vmatprep.subr.mxu0 0.0
    %281 = vmatpush2.msra.mxu0 0.0
    %282 = vmatprep.subr.mxu0 0.0
    %283 = vmatpush2.msra.mxu0 0.0
    %284 = vmatprep.subr.mxu0 0.0
    %285 = vmatpush2.msra.mxu0 0.0
    %286 = vmatprep.subr.mxu0 0.0
    %287 = vmatpush2.msra.mxu0 0.0
    %288 = vmatprep.subr.mxu0 0.0
    %289 = vmatpush2.msra.mxu0 0.0
    %290 = vmatprep.subr.mxu0 0.0
    %291 = vmatpush2.msra.mxu0 0.0
    %292 = vmatprep.subr.mxu0 0.0
    %293 = vmatpush2.msra.mxu0 0.0
    %294 = vmatprep.subr.mxu0 0.0
    %295 = vmatpush2.msra.mxu0 0.0
    %296 = vmatprep.subr.mxu0 0.0
    %297 = vmatpush2.msra.mxu0 0.0
    %298 = vmatprep.subr.mxu0 0.0
    %299 = vmatpush2.msra.mxu0 0.0
    %300 = vmatprep.subr.mxu0 0.0
    %301 = vmatpush2.msra.mxu0 0.0
    %302 = vmatprep.subr.mxu0 0.0
    %303 = vmatpush2.msra.mxu0 0.0
    %304 = vmatprep.subr.mxu0 0.0
    %305 = vmatpush2.msra.mxu0 0.0
    %306 = vmatprep.subr.mxu0 0.0
    %307 = vmatpush2.msra.mxu0 0.0
    %308 = vmatprep.subr.mxu0 0.0
    %309 = vmatpush2.msra.mxu0 0.0
    %310 = vmatprep.mubr.f32.mxu0 0.0
    %311 = vmatmul.mubr.f32.gmra.mxu0 %v143
    %v312 = vpop.f32.mrf.mxu0
    %v313 = vadd.f32 0.0, %v312
    %v314 = vpop.f32.mrf.mxu0
    %315 = vdwg.mxu0
    %v316 = vld [vmem:[#allocation2 + $0xd8] sm:$0xff]
    %v317 = vld [vmem:[#allocation2 + $0xe0] sm:$0xff]
    %v318 = vld [vmem:[#allocation2 + $0xe8] sm:$0xff]
    %v319 = vld [vmem:[#allocation2 + $0xf0] sm:$0xff]
    %v320 = vld [vmem:[#allocation2 + $0xf8] sm:$0xff]
    %v321 = vld [vmem:[#allocation2 + $0x100] sm:$0xff]
    %v322 = vld [vmem:[#allocation2 + $0x108] sm:$0xff]
    %v323 = vld [vmem:[#allocation2 + $0x110] sm:$0xff]
    %v324 = vld [vmem:[#allocation2 + $0x118] sm:$0xff]
    %v325 = vld [vmem:[#allocation2 + $0x120] sm:$0xff]
    %v326 = vld [vmem:[#allocation2 + $0x128] sm:$0xff]
    %v327 = vld [vmem:[#allocation2 + $0x130] sm:$0xff]
    %v328 = vld [vmem:[#allocation2 + $0x138] sm:$0xff]
    %v329 = vld [vmem:[#allocation2 + $0x140] sm:$0xff]
    %v330 = vld [vmem:[#allocation2 + $0x148] sm:$0xff]
    %v331 = vld [vmem:[#allocation2 + $0x150] sm:$0xff]
    %v332 = vld [vmem:[#allocation2 + $0x45a] sm:$0x1]
    %v333 = vlaneseq
    %v334 = vshrl.u32 %v333, 7
    %v335 = vsub.s32 0, %v334
    %v336 = vrot.slane %v332, %v335
    %337 = vmatprep.subr.mxu0 0.0
    %338 = vmatpush1.msra.mxu0 %v331
    %339 = vmatprep.subr.mxu0 0.0
    %340 = vmatpush1.msra.mxu0 %v330
    %341 = vmatprep.subr.mxu0 0.0
    %342 = vmatpush1.msra.mxu0 %v329
    %343 = vmatprep.subr.mxu0 0.0
    %344 = vmatpush1.msra.mxu0 %v328
    %345 = vmatprep.subr.mxu0 0.0
    %346 = vmatpush1.msra.mxu0 %v327
    %347 = vmatprep.subr.mxu0 0.0
    %348 = vmatpush1.msra.mxu0 %v326
    %349 = vmatprep.subr.mxu0 0.0
    %350 = vmatpush1.msra.mxu0 %v325
    %351 = vmatprep.subr.mxu0 0.0
    %352 = vmatpush1.msra.mxu0 %v324
    %353 = vmatprep.subr.mxu0 0.0
    %354 = vmatpush1.msra.mxu0 %v323
    %355 = vmatprep.subr.mxu0 0.0
    %356 = vmatpush1.msra.mxu0 %v322
    %357 = vmatprep.subr.mxu0 0.0
    %358 = vmatpush1.msra.mxu0 %v321
    %359 = vmatprep.subr.mxu0 0.0
    %360 = vmatpush1.msra.mxu0 %v320
    %361 = vmatprep.subr.mxu0 0.0
    %362 = vmatpush1.msra.mxu0 %v319
    %363 = vmatprep.subr.mxu0 0.0
    %364 = vmatpush1.msra.mxu0 %v318
    %365 = vmatprep.subr.mxu0 0.0
    %366 = vmatpush1.msra.mxu0 %v317
    %367 = vmatprep.subr.mxu0 0.0
    %368 = vmatpush1.msra.mxu0 %v316
    %369 = vmatprep.subr.mxu0 0.0
    %370 = vmatpush2.msra.mxu0 0.0
    %371 = vmatprep.subr.mxu0 0.0
    %372 = vmatpush2.msra.mxu0 0.0
    %373 = vmatprep.subr.mxu0 0.0
    %374 = vmatpush2.msra.mxu0 0.0
    %375 = vmatprep.subr.mxu0 0.0
    %376 = vmatpush2.msra.mxu0 0.0
    %377 = vmatprep.subr.mxu0 0.0
    %378 = vmatpush2.msra.mxu0 0.0
    %379 = vmatprep.subr.mxu0 0.0
    %380 = vmatpush2.msra.mxu0 0.0
    %381 = vmatprep.subr.mxu0 0.0
    %382 = vmatpush2.msra.mxu0 0.0
    %383 = vmatprep.subr.mxu0 0.0
    %384 = vmatpush2.msra.mxu0 0.0
    %385 = vmatprep.subr.mxu0 0.0
    %386 = vmatpush2.msra.mxu0 0.0
    %387 = vmatprep.subr.mxu0 0.0
    %388 = vmatpush2.msra.mxu0 0.0
    %389 = vmatprep.subr.mxu0 0.0
    %390 = vmatpush2.msra.mxu0 0.0
    %391 = vmatprep.subr.mxu0 0.0
    %392 = vmatpush2.msra.mxu0 0.0
    %393 = vmatprep.subr.mxu0 0.0
    %394 = vmatpush2.msra.mxu0 0.0
    %395 = vmatprep.subr.mxu0 0.0
    %396 = vmatpush2.msra.mxu0 0.0
    %397 = vmatprep.subr.mxu0 0.0
    %398 = vmatpush2.msra.mxu0 0.0
    %399 = vmatprep.subr.mxu0 0.0
    %400 = vmatpush2.msra.mxu0 0.0
    %401 = vmatprep.mubr.f32.mxu0 0.0
    %402 = vmatmul.mubr.f32.gmra.mxu0 %v143
    %v403 = vpop.f32.mrf.mxu0
    %v404 = vadd.f32 %v336, %v403
    %v405 = vpop.f32.mrf.mxu0
    %406 = vdwg.mxu0
    %v407 = vmul.f32 %v404, 0.01
    %v408 = vmax.f32 %v404, %v407
    %v409 = vld [vmem:[#allocation2 + $0x158] sm:$0xff]
    %v410 = vld [vmem:[#allocation2 + $0x160] sm:$0xff]
    %v411 = vld [vmem:[#allocation2 + $0x168] sm:$0xff]
    %v412 = vld [vmem:[#allocation2 + $0x170] sm:$0xff]
    %v413 = vld [vmem:[#allocation2 + $0x178] sm:$0xff]
    %v414 = vld [vmem:[#allocation2 + $0x180] sm:$0xff]
    %v415 = vld [vmem:[#allocation2 + $0x188] sm:$0xff]
    %v416 = vld [vmem:[#allocation2 + $0x190] sm:$0xff]
    %v417 = vld [vmem:[#allocation2 + $0x198] sm:$0xff]
    %v418 = vld [vmem:[#allocation2 + $0x1a0] sm:$0xff]
    %v419 = vld [vmem:[#allocation2 + $0x1a8] sm:$0xff]
    %v420 = vld [vmem:[#allocation2 + $0x1b0] sm:$0xff]
    %v421 = vld [vmem:[#allocation2 + $0x1b8] sm:$0xff]
    %v422 = vld [vmem:[#allocation2 + $0x1c0] sm:$0xff]
    %v423 = vld [vmem:[#allocation2 + $0x1c8] sm:$0xff]
    %v424 = vld [vmem:[#allocation2 + $0x1d0] sm:$0xff]
    %425 = vmatprep.subr.mxu0 0.0
    %426 = vmatpush1.msra.mxu0 %v424
    %427 = vmatprep.subr.mxu0 0.0
    %428 = vmatpush1.msra.mxu0 %v423
    %429 = vmatprep.subr.mxu0 0.0
    %430 = vmatpush1.msra.mxu0 %v422
    %431 = vmatprep.subr.mxu0 0.0
    %432 = vmatpush1.msra.mxu0 %v421
    %433 = vmatprep.subr.mxu0 0.0
    %434 = vmatpush1.msra.mxu0 %v420
    %435 = vmatprep.subr.mxu0 0.0
    %436 = vmatpush1.msra.mxu0 %v419
    %437 = vmatprep.subr.mxu0 0.0
    %438 = vmatpush1.msra.mxu0 %v418
    %439 = vmatprep.subr.mxu0 0.0
    %440 = vmatpush1.msra.mxu0 %v417
    %441 = vmatprep.subr.mxu0 0.0
    %442 = vmatpush1.msra.mxu0 %v416
    %443 = vmatprep.subr.mxu0 0.0
    %444 = vmatpush1.msra.mxu0 %v415
    %445 = vmatprep.subr.mxu0 0.0
    %446 = vmatpush1.msra.mxu0 %v414
    %447 = vmatprep.subr.mxu0 0.0
    %448 = vmatpush1.msra.mxu0 %v413
    %449 = vmatprep.subr.mxu0 0.0
    %450 = vmatpush1.msra.mxu0 %v412
    %451 = vmatprep.subr.mxu0 0.0
    %452 = vmatpush1.msra.mxu0 %v411
    %453 = vmatprep.subr.mxu0 0.0
    %454 = vmatpush1.msra.mxu0 %v410
    %455 = vmatprep.subr.mxu0 0.0
    %456 = vmatpush1.msra.mxu0 %v409
    %457 = vmatprep.subr.mxu0 0.0
    %458 = vmatpush2.msra.mxu0 0.0
    %459 = vmatprep.subr.mxu0 0.0
    %460 = vmatpush2.msra.mxu0 0.0
    %461 = vmatprep.subr.mxu0 0.0
    %462 = vmatpush2.msra.mxu0 0.0
    %463 = vmatprep.subr.mxu0 0.0
    %464 = vmatpush2.msra.mxu0 0.0
    %465 = vmatprep.subr.mxu0 0.0
    %466 = vmatpush2.msra.mxu0 0.0
    %467 = vmatprep.subr.mxu0 0.0
    %468 = vmatpush2.msra.mxu0 0.0
    %469 = vmatprep.subr.mxu0 0.0
    %470 = vmatpush2.msra.mxu0 0.0
    %471 = vmatprep.subr.mxu0 0.0
    %472 = vmatpush2.msra.mxu0 0.0
    %473 = vmatprep.subr.mxu0 0.0
    %474 = vmatpush2.msra.mxu0 0.0
    %475 = vmatprep.subr.mxu0 0.0
    %476 = vmatpush2.msra.mxu0 0.0
    %477 = vmatprep.subr.mxu0 0.0
    %478 = vmatpush2.msra.mxu0 0.0
    %479 = vmatprep.subr.mxu0 0.0
    %480 = vmatpush2.msra.mxu0 0.0
    %481 = vmatprep.subr.mxu0 0.0
    %482 = vmatpush2.msra.mxu0 0.0
    %483 = vmatprep.subr.mxu0 0.0
    %484 = vmatpush2.msra.mxu0 0.0
    %485 = vmatprep.subr.mxu0 0.0
    %486 = vmatpush2.msra.mxu0 0.0
    %487 = vmatprep.subr.mxu0 0.0
    %488 = vmatpush2.msra.mxu0 0.0
    %489 = vmatprep.mubr.f32.mxu0 0.0
    %490 = vmatmul.mubr.f32.gmra.mxu0 %v143
    %v491 = vpop.f32.mrf.mxu0
    %v492 = vadd.f32 %v336, %v491
    %v493 = vpop.f32.mrf.mxu0
    %494 = vdwg.mxu0
    %v495 = vmul.f32 %v492, 0.01
    %v496 = vmax.f32 %v492, %v495
    %v497 = vld [vmem:[#allocation2 + $0x1d8] sm:$0xff]
    %v498 = vld [vmem:[#allocation2 + $0x1e0] sm:$0xff]
    %v499 = vld [vmem:[#allocation2 + $0x1e8] sm:$0xff]
    %v500 = vld [vmem:[#allocation2 + $0x1f0] sm:$0xff]
    %v501 = vld [vmem:[#allocation2 + $0x1f8] sm:$0xff]
    %v502 = vld [vmem:[#allocation2 + $0x200] sm:$0xff]
    %v503 = vld [vmem:[#allocation2 + $0x208] sm:$0xff]
    %v504 = vld [vmem:[#allocation2 + $0x210] sm:$0xff]
    %v505 = vld [vmem:[#allocation2 + $0x218] sm:$0xff]
    %v506 = vld [vmem:[#allocation2 + $0x220] sm:$0xff]
    %v507 = vld [vmem:[#allocation2 + $0x228] sm:$0xff]
    %v508 = vld [vmem:[#allocation2 + $0x230] sm:$0xff]
    %v509 = vld [vmem:[#allocation2 + $0x238] sm:$0xff]
    %v510 = vld [vmem:[#allocation2 + $0x240] sm:$0xff]
    %v511 = vld [vmem:[#allocation2 + $0x248] sm:$0xff]
    %v512 = vld [vmem:[#allocation2 + $0x250] sm:$0xff]
    %513 = vmatprep.subr.mxu0 0.0
    %514 = vmatpush1.msra.mxu0 %v512
    %515 = vmatprep.subr.mxu0 0.0
    %516 = vmatpush1.msra.mxu0 %v511
    %517 = vmatprep.subr.mxu0 0.0
    %518 = vmatpush1.msra.mxu0 %v510
    %519 = vmatprep.subr.mxu0 0.0
    %520 = vmatpush1.msra.mxu0 %v509
    %521 = vmatprep.subr.mxu0 0.0
    %522 = vmatpush1.msra.mxu0 %v508
    %523 = vmatprep.subr.mxu0 0.0
    %524 = vmatpush1.msra.mxu0 %v507
    %525 = vmatprep.subr.mxu0 0.0
    %526 = vmatpush1.msra.mxu0 %v506
    %527 = vmatprep.subr.mxu0 0.0
    %528 = vmatpush1.msra.mxu0 %v505
    %529 = vmatprep.subr.mxu0 0.0
    %530 = vmatpush1.msra.mxu0 %v504
    %531 = vmatprep.subr.mxu0 0.0
    %532 = vmatpush1.msra.mxu0 %v503
    %533 = vmatprep.subr.mxu0 0.0
    %534 = vmatpush1.msra.mxu0 %v502
    %535 = vmatprep.subr.mxu0 0.0
    %536 = vmatpush1.msra.mxu0 %v501
    %537 = vmatprep.subr.mxu0 0.0
    %538 = vmatpush1.msra.mxu0 %v500
    %539 = vmatprep.subr.mxu0 0.0
    %540 = vmatpush1.msra.mxu0 %v499
    %541 = vmatprep.subr.mxu0 0.0
    %542 = vmatpush1.msra.mxu0 %v498
    %543 = vmatprep.subr.mxu0 0.0
    %544 = vmatpush1.msra.mxu0 %v497
    %545 = vmatprep.subr.mxu0 0.0
    %546 = vmatpush2.msra.mxu0 0.0
    %547 = vmatprep.subr.mxu0 0.0
    %548 = vmatpush2.msra.mxu0 0.0
    %549 = vmatprep.subr.mxu0 0.0
    %550 = vmatpush2.msra.mxu0 0.0
    %551 = vmatprep.subr.mxu0 0.0
    %552 = vmatpush2.msra.mxu0 0.0
    %553 = vmatprep.subr.mxu0 0.0
    %554 = vmatpush2.msra.mxu0 0.0
    %555 = vmatprep.subr.mxu0 0.0
    %556 = vmatpush2.msra.mxu0 0.0
    %557 = vmatprep.subr.mxu0 0.0
    %558 = vmatpush2.msra.mxu0 0.0
    %559 = vmatprep.subr.mxu0 0.0
    %560 = vmatpush2.msra.mxu0 0.0
    %561 = vmatprep.subr.mxu0 0.0
    %562 = vmatpush2.msra.mxu0 0.0
    %563 = vmatprep.subr.mxu0 0.0
    %564 = vmatpush2.msra.mxu0 0.0
    %565 = vmatprep.subr.mxu0 0.0
    %566 = vmatpush2.msra.mxu0 0.0
    %567 = vmatprep.subr.mxu0 0.0
    %568 = vmatpush2.msra.mxu0 0.0
    %569 = vmatprep.subr.mxu0 0.0
    %570 = vmatpush2.msra.mxu0 0.0
    %571 = vmatprep.subr.mxu0 0.0
    %572 = vmatpush2.msra.mxu0 0.0
    %573 = vmatprep.subr.mxu0 0.0
    %574 = vmatpush2.msra.mxu0 0.0
    %575 = vmatprep.subr.mxu0 0.0
    %576 = vmatpush2.msra.mxu0 0.0
    %577 = vmatprep.mubr.f32.mxu0 0.0
    %578 = vmatmul.mubr.f32.gmra.mxu0 %v229
    %v579 = vpop.f32.mrf.mxu0
    %v580 = vadd.f32 0.0, %v579
    %v581 = vpop.f32.mrf.mxu0
    %582 = vdwg.mxu0
    %v583 = vmul.f32 %v580, %v313
    %v584 = vld [vmem:[#allocation2 + $0x3d8] sm:$0xff]
    %v585 = vld [vmem:[#allocation2 + $0x3e0] sm:$0xff]
    %v586 = vld [vmem:[#allocation2 + $0x3e8] sm:$0xff]
    %v587 = vld [vmem:[#allocation2 + $0x3f0] sm:$0xff]
    %v588 = vld [vmem:[#allocation2 + $0x3f8] sm:$0xff]
    %v589 = vld [vmem:[#allocation2 + $0x400] sm:$0xff]
    %v590 = vld [vmem:[#allocation2 + $0x408] sm:$0xff]
    %v591 = vld [vmem:[#allocation2 + $0x410] sm:$0xff]
    %v592 = vld [vmem:[#allocation2 + $0x418] sm:$0xff]
    %v593 = vld [vmem:[#allocation2 + $0x420] sm:$0xff]
    %v594 = vld [vmem:[#allocation2 + $0x428] sm:$0xff]
    %v595 = vld [vmem:[#allocation2 + $0x430] sm:$0xff]
    %v596 = vld [vmem:[#allocation2 + $0x438] sm:$0xff]
    %v597 = vld [vmem:[#allocation2 + $0x440] sm:$0xff]
    %v598 = vld [vmem:[#allocation2 + $0x448] sm:$0xff]
    %v599 = vld [vmem:[#allocation2 + $0x450] sm:$0xff]
    %600 = vmatprep.subr.mxu0 0.0
    %601 = vmatpush1.msra.mxu0 %v599
    %602 = vmatprep.subr.mxu0 0.0
    %603 = vmatpush1.msra.mxu0 %v598
    %604 = vmatprep.subr.mxu0 0.0
    %605 = vmatpush1.msra.mxu0 %v597
    %606 = vmatprep.subr.mxu0 0.0
    %607 = vmatpush1.msra.mxu0 %v596
    %608 = vmatprep.subr.mxu0 0.0
    %609 = vmatpush1.msra.mxu0 %v595
    %610 = vmatprep.subr.mxu0 0.0
    %611 = vmatpush1.msra.mxu0 %v594
    %612 = vmatprep.subr.mxu0 0.0
    %613 = vmatpush1.msra.mxu0 %v593
    %614 = vmatprep.subr.mxu0 0.0
    %615 = vmatpush1.msra.mxu0 %v592
    %616 = vmatprep.subr.mxu0 0.0
    %617 = vmatpush1.msra.mxu0 %v591
    %618 = vmatprep.subr.mxu0 0.0
    %619 = vmatpush1.msra.mxu0 %v590
    %620 = vmatprep.subr.mxu0 0.0
    %621 = vmatpush1.msra.mxu0 %v589
    %622 = vmatprep.subr.mxu0 0.0
    %623 = vmatpush1.msra.mxu0 %v588
    %624 = vmatprep.subr.mxu0 0.0
    %625 = vmatpush1.msra.mxu0 %v587
    %626 = vmatprep.subr.mxu0 0.0
    %627 = vmatpush1.msra.mxu0 %v586
    %628 = vmatprep.subr.mxu0 0.0
    %629 = vmatpush1.msra.mxu0 %v585
    %630 = vmatprep.subr.mxu0 0.0
    %631 = vmatpush1.msra.mxu0 %v584
    %632 = vmatprep.subr.mxu0 0.0
    %633 = vmatpush2.msra.mxu0 0.0
    %634 = vmatprep.subr.mxu0 0.0
    %635 = vmatpush2.msra.mxu0 0.0
    %636 = vmatprep.subr.mxu0 0.0
    %637 = vmatpush2.msra.mxu0 0.0
    %638 = vmatprep.subr.mxu0 0.0
    %639 = vmatpush2.msra.mxu0 0.0
    %640 = vmatprep.subr.mxu0 0.0
    %641 = vmatpush2.msra.mxu0 0.0
    %642 = vmatprep.subr.mxu0 0.0
    %643 = vmatpush2.msra.mxu0 0.0
    %644 = vmatprep.subr.mxu0 0.0
    %645 = vmatpush2.msra.mxu0 0.0
    %646 = vmatprep.subr.mxu0 0.0
    %647 = vmatpush2.msra.mxu0 0.0
    %648 = vmatprep.subr.mxu0 0.0
    %649 = vmatpush2.msra.mxu0 0.0
    %650 = vmatprep.subr.mxu0 0.0
    %651 = vmatpush2.msra.mxu0 0.0
    %652 = vmatprep.subr.mxu0 0.0
    %653 = vmatpush2.msra.mxu0 0.0
    %654 = vmatprep.subr.mxu0 0.0
    %655 = vmatpush2.msra.mxu0 0.0
    %656 = vmatprep.subr.mxu0 0.0
    %657 = vmatpush2.msra.mxu0 0.0
    %658 = vmatprep.subr.mxu0 0.0
    %659 = vmatpush2.msra.mxu0 0.0
    %660 = vmatprep.subr.mxu0 0.0
    %661 = vmatpush2.msra.mxu0 0.0
    %662 = vmatprep.subr.mxu0 0.0
    %663 = vmatpush2.msra.mxu0 0.0
    %664 = vmatprep.mubr.f32.mxu0 0.0
    %665 = vmatmul.mubr.f32.gmra.mxu0 %v583
    %v666 = vpop.f32.mrf.mxu0
    %v667 = vadd.f32 0.0, %v666
    %v668 = vpop.f32.mrf.mxu0
    %669 = vdwg.mxu0
    %v670 = vmul.f32 %v667, 0.25
    %v671 = vmul.f32 %v670, 1.442695
    %v672 = vpow.pop %v671
    %v673 = vadd.f32 %v672, 1.0
    %v674 = vrcp.pop %v673
    %v675 = vmul.f32 1.0, %v674
    %v676 = vsub.f32 %v408, %v496
    %v677 = vmul.f32 %v675, %v676
    %v678 = vadd.f32 %v496, %v677
    %v679 = vld [vmem:[#allocation2 + $0x258] sm:$0xff]
    %v680 = vld [vmem:[#allocation2 + $0x260] sm:$0xff]
    %v681 = vld [vmem:[#allocation2 + $0x268] sm:$0xff]
    %v682 = vld [vmem:[#allocation2 + $0x270] sm:$0xff]
    %v683 = vld [vmem:[#allocation2 + $0x278] sm:$0xff]
    %v684 = vld [vmem:[#allocation2 + $0x280] sm:$0xff]
    %v685 = vld [vmem:[#allocation2 + $0x288] sm:$0xff]
    %v686 = vld [vmem:[#allocation2 + $0x290] sm:$0xff]
    %v687 = vld [vmem:[#allocation2 + $0x298] sm:$0xff]
    %v688 = vld [vmem:[#allocation2 + $0x2a0] sm:$0xff]
    %v689 = vld [vmem:[#allocation2 + $0x2a8] sm:$0xff]
    %v690 = vld [vmem:[#allocation2 + $0x2b0] sm:$0xff]
    %v691 = vld [vmem:[#allocation2 + $0x2b8] sm:$0xff]
    %v692 = vld [vmem:[#allocation2 + $0x2c0] sm:$0xff]
    %v693 = vld [vmem:[#allocation2 + $0x2c8] sm:$0xff]
    %v694 = vld [vmem:[#allocation2 + $0x2d0] sm:$0xff]
    %v695 = vld [vmem:[#allocation2 + $0x2d8] sm:$0xff]
    %v696 = vld [vmem:[#allocation2 + $0x2e0] sm:$0xff]
    %v697 = vld [vmem:[#allocation2 + $0x2e8] sm:$0xff]
    %v698 = vld [vmem:[#allocation2 + $0x2f0] sm:$0xff]
    %v699 = vld [vmem:[#allocation2 + $0x2f8] sm:$0xff]
    %v700 = vld [vmem:[#allocation2 + $0x300] sm:$0xff]
    %v701 = vld [vmem:[#allocation2 + $0x308] sm:$0xff]
    %v702 = vld [vmem:[#allocation2 + $0x310] sm:$0xff]
    %v703 = vld [vmem:[#allocation2 + $0x318] sm:$0xff]
    %v704 = vld [vmem:[#allocation2 + $0x320] sm:$0xff]
    %v705 = vld [vmem:[#allocation2 + $0x328] sm:$0xff]
    %v706 = vld [vmem:[#allocation2 + $0x330] sm:$0xff]
    %v707 = vld [vmem:[#allocation2 + $0x338] sm:$0xff]
    %v708 = vld [vmem:[#allocation2 + $0x340] sm:$0xff]
    %v709 = vld [vmem:[#allocation2 + $0x348] sm:$0xff]
    %v710 = vld [vmem:[#allocation2 + $0x350] sm:$0xff]
    %711 = vmatprep.subr.mxu0 0.0
    %712 = vmatpush1.msra.mxu0 %v710
    %713 = vmatprep.subr.mxu0 0.0
    %714 = vmatpush1.msra.mxu0 %v709
    %715 = vmatprep.subr.mxu0 0.0
    %716 = vmatpush1.msra.mxu0 %v708
    %717 = vmatprep.subr.mxu0 0.0
    %718 = vmatpush1.msra.mxu0 %v707
    %719 = vmatprep.subr.mxu0 0.0
    %720 = vmatpush1.msra.mxu0 %v706
    %721 = vmatprep.subr.mxu0 0.0
    %722 = vmatpush1.msra.mxu0 %v705
    %723 = vmatprep.subr.mxu0 0.0
    %724 = vmatpush1.msra.mxu0 %v704
    %725 = vmatprep.subr.mxu0 0.0
    %726 = vmatpush1.msra.mxu0 %v703
    %727 = vmatprep.subr.mxu0 0.0
    %728 = vmatpush1.msra.mxu0 %v702
    %729 = vmatprep.subr.mxu0 0.0
    %730 = vmatpush1.msra.mxu0 %v701
    %731 = vmatprep.subr.mxu0 0.0
    %732 = vmatpush1.msra.mxu0 %v700
    %733 = vmatprep.subr.mxu0 0.0
    %734 = vmatpush1.msra.mxu0 %v699
    %735 = vmatprep.subr.mxu0 0.0
    %736 = vmatpush1.msra.mxu0 %v698
    %737 = vmatprep.subr.mxu0 0.0
    %738 = vmatpush1.msra.mxu0 %v697
    %739 = vmatprep.subr.mxu0 0.0
    %740 = vmatpush1.msra.mxu0 %v696
    %741 = vmatprep.subr.mxu0 0.0
    %742 = vmatpush1.msra.mxu0 %v695
    %743 = vmatprep.subr.mxu0 0.0
    %744 = vmatpush2.msra.mxu0 0.0
    %745 = vmatprep.subr.mxu0 0.0
    %746 = vmatpush2.msra.mxu0 0.0
    %747 = vmatprep.subr.mxu0 0.0
    %748 = vmatpush2.msra.mxu0 0.0
    %749 = vmatprep.subr.mxu0 0.0
    %750 = vmatpush2.msra.mxu0 0.0
    %751 = vmatprep.subr.mxu0 0.0
    %752 = vmatpush2.msra.mxu0 0.0
    %753 = vmatprep.subr.mxu0 0.0
    %754 = vmatpush2.msra.mxu0 0.0
    %755 = vmatprep.subr.mxu0 0.0
    %756 = vmatpush2.msra.mxu0 0.0
    %757 = vmatprep.subr.mxu0 0.0
    %758 = vmatpush2.msra.mxu0 0.0
    %759 = vmatprep.subr.mxu0 0.0
    %760 = vmatpush2.msra.mxu0 0.0
    %761 = vmatprep.subr.mxu0 0.0
    %762 = vmatpush2.msra.mxu0 0.0
    %763 = vmatprep.subr.mxu0 0.0
    %764 = vmatpush2.msra.mxu0 0.0
    %765 = vmatprep.subr.mxu0 0.0
    %766 = vmatpush2.msra.mxu0 0.0
    %767 = vmatprep.subr.mxu0 0.0
    %768 = vmatpush2.msra.mxu0 0.0
    %769 = vmatprep.subr.mxu0 0.0
    %770 = vmatpush2.msra.mxu0 0.0
    %771 = vmatprep.subr.mxu0 0.0
    %772 = vmatpush2.msra.mxu0 0.0
    %773 = vmatprep.subr.mxu0 0.0
    %774 = vmatpush2.msra.mxu0 0.0
    %775 = vmatprep.mubr.f32.mxu0 0.0
    %776 = vmatmul.mubr.f32.gmra.mxu0 %v678
    %v777 = vpop.f32.mrf.mxu0
    %v778 = vadd.f32 0.0, %v777
    %v779 = vpop.f32.mrf.mxu0
    %780 = vdwg.mxu0
    %781 = vmatprep.subr.mxu0 0.0
    %782 = vmatpush1.msra.mxu0 %v694
    %783 = vmatprep.subr.mxu0 0.0
    %784 = vmatpush1.msra.mxu0 %v693
    %785 = vmatprep.subr.mxu0 0.0
    %786 = vmatpush1.msra.mxu0 %v692
    %787 = vmatprep.subr.mxu0 0.0
    %788 = vmatpush1.msra.mxu0 %v691
    %789 = vmatprep.subr.mxu0 0.0
    %790 = vmatpush1.msra.mxu0 %v690
    %791 = vmatprep.subr.mxu0 0.0
    %792 = vmatpush1.msra.mxu0 %v689
    %793 = vmatprep.subr.mxu0 0.0
    %794 = vmatpush1.msra.mxu0 %v688
    %795 = vmatprep.subr.mxu0 0.0
    %796 = vmatpush1.msra.mxu0 %v687
    %797 = vmatprep.subr.mxu0 0.0
    %798 = vmatpush1.msra.mxu0 %v686
    %799 = vmatprep.subr.mxu0 0.0
    %800 = vmatpush1.msra.mxu0 %v685
    %801 = vmatprep.subr.mxu0 0.0
    %802 = vmatpush1.msra.mxu0 %v684
    %803 = vmatprep.subr.mxu0 0.0
    %804 = vmatpush1.msra.mxu0 %v683
    %805 = vmatprep.subr.mxu0 0.0
    %806 = vmatpush1.msra.mxu0 %v682
    %807 = vmatprep.subr.mxu0 0.0
    %808 = vmatpush1.msra.mxu0 %v681
    %809 = vmatprep.subr.mxu0 0.0
    %810 = vmatpush1.msra.mxu0 %v680
    %811 = vmatprep.subr.mxu0 0.0
    %812 = vmatpush1.msra.mxu0 %v679
    %813 = vmatprep.subr.mxu0 0.0
    %814 = vmatpush2.msra.mxu0 0.0
    %815 = vmatprep.subr.mxu0 0.0
    %816 = vmatpush2.msra.mxu0 0.0
    %817 = vmatprep.subr.mxu0 0.0
    %818 = vmatpush2.msra.mxu0 0.0
    %819 = vmatprep.subr.mxu0 0.0
    %820 = vmatpush2.msra.mxu0 0.0
    %821 = vmatprep.subr.mxu0 0.0
    %822 = vmatpush2.msra.mxu0 0.0
    %823 = vmatprep.subr.mxu0 0.0
    %824 = vmatpush2.msra.mxu0 0.0
    %825 = vmatprep.subr.mxu0 0.0
    %826 = vmatpush2.msra.mxu0 0.0
    %827 = vmatprep.subr.mxu0 0.0
    %828 = vmatpush2.msra.mxu0 0.0
    %829 = vmatprep.subr.mxu0 0.0
    %830 = vmatpush2.msra.mxu0 0.0
    %831 = vmatprep.subr.mxu0 0.0
    %832 = vmatpush2.msra.mxu0 0.0
    %833 = vmatprep.subr.mxu0 0.0
    %834 = vmatpush2.msra.mxu0 0.0
    %835 = vmatprep.subr.mxu0 0.0
    %836 = vmatpush2.msra.mxu0 0.0
    %837 = vmatprep.subr.mxu0 0.0
    %838 = vmatpush2.msra.mxu0 0.0
    %839 = vmatprep.subr.mxu0 0.0
    %840 = vmatpush2.msra.mxu0 0.0
    %841 = vmatprep.subr.mxu0 0.0
    %842 = vmatpush2.msra.mxu0 0.0
    %843 = vmatprep.subr.mxu0 0.0
    %844 = vmatpush2.msra.mxu0 0.0
    %845 = vmatprep.mubr.f32.mxu0 0.0
    %846 = vmatmul.mubr.f32.gmra.mxu0 %v229
    %v847 = vpop.f32.mrf.mxu0
    %v848 = vadd.f32 %v778, %v847
    %v849 = vpop.f32.mrf.mxu0
    %850 = vdwg.mxu0
    %v851 = vld [vmem:[#allocation2 + $0x45b] sm:$0x1]
    %v852 = vlaneseq
    %v853 = vshrl.u32 %v852, 7
    %v854 = vsub.s32 0, %v853
    %v855 = vrot.slane %v851, %v854
    %v856 = vadd.f32 %v848, %v855
    %v857 = vmul.f32 %v856, 0.01
    %v858 = vmax.f32 %v856, %v857
    %v859 = vld [vmem:[#allocation2 + $0x358] sm:$0xff]
    %v860 = vld [vmem:[#allocation2 + $0x360] sm:$0xff]
    %v861 = vld [vmem:[#allocation2 + $0x368] sm:$0xff]
    %v862 = vld [vmem:[#allocation2 + $0x370] sm:$0xff]
    %v863 = vld [vmem:[#allocation2 + $0x378] sm:$0xff]
    %v864 = vld [vmem:[#allocation2 + $0x380] sm:$0xff]
    %v865 = vld [vmem:[#allocation2 + $0x388] sm:$0xff]
    %v866 = vld [vmem:[#allocation2 + $0x390] sm:$0xff]
    %v867 = vld [vmem:[#allocation2 + $0x398] sm:$0xff]
    %v868 = vld [vmem:[#allocation2 + $0x3a0] sm:$0xff]
    %v869 = vld [vmem:[#allocation2 + $0x3a8] sm:$0xff]
    %v870 = vld [vmem:[#allocation2 + $0x3b0] sm:$0xff]
    %v871 = vld [vmem:[#allocation2 + $0x3b8] sm:$0xff]
    %v872 = vld [vmem:[#allocation2 + $0x3c0] sm:$0xff]
    %v873 = vld [vmem:[#allocation2 + $0x3c8] sm:$0xff]
    %v874 = vld [vmem:[#allocation2 + $0x3d0] sm:$0xff]
    %v875 = vld [vmem:[#allocation2 + $0x45c] sm:$0x1]
    %v876 = vlaneseq
    %v877 = vshrl.u32 %v876, 7
    %v878 = vsub.s32 0, %v877
    %v879 = vrot.slane %v875, %v878
    %880 = vmatprep.subr.mxu0 0.0
    %881 = vmatpush1.msra.mxu0 %v874
    %882 = vmatprep.subr.mxu0 0.0
    %883 = vmatpush1.msra.mxu0 %v873
    %884 = vmatprep.subr.mxu0 0.0
    %885 = vmatpush1.msra.mxu0 %v872
    %886 = vmatprep.subr.mxu0 0.0
    %887 = vmatpush1.msra.mxu0 %v871
    %888 = vmatprep.subr.mxu0 0.0
    %889 = vmatpush1.msra.mxu0 %v870
    %890 = vmatprep.subr.mxu0 0.0
    %891 = vmatpush1.msra.mxu0 %v869
    %892 = vmatprep.subr.mxu0 0.0
    %893 = vmatpush1.msra.mxu0 %v868
    %894 = vmatprep.subr.mxu0 0.0
    %895 = vmatpush1.msra.mxu0 %v867
    %896 = vmatprep.subr.mxu0 0.0
    %897 = vmatpush1.msra.mxu0 %v866
    %898 = vmatprep.subr.mxu0 0.0
    %899 = vmatpush1.msra.mxu0 %v865
    %900 = vmatprep.subr.mxu0 0.0
    %901 = vmatpush1.msra.mxu0 %v864
    %902 = vmatprep.subr.mxu0 0.0
    %903 = vmatpush1.msra.mxu0 %v863
    %904 = vmatprep.subr.mxu0 0.0
    %905 = vmatpush1.msra.mxu0 %v862
    %906 = vmatprep.subr.mxu0 0.0
    %907 = vmatpush1.msra.mxu0 %v861
    %908 = vmatprep.subr.mxu0 0.0
    %909 = vmatpush1.msra.mxu0 %v860
    %910 = vmatprep.subr.mxu0 0.0
    %911 = vmatpush1.msra.mxu0 %v859
    %912 = vmatprep.subr.mxu0 0.0
    %913 = vmatpush2.msra.mxu0 0.0
    %914 = vmatprep.subr.mxu0 0.0
    %915 = vmatpush2.msra.mxu0 0.0
    %916 = vmatprep.subr.mxu0 0.0
    %917 = vmatpush2.msra.mxu0 0.0
    %918 = vmatprep.subr.mxu0 0.0
    %919 = vmatpush2.msra.mxu0 0.0
    %920 = vmatprep.subr.mxu0 0.0
    %921 = vmatpush2.msra.mxu0 0.0
    %922 = vmatprep.subr.mxu0 0.0
    %923 = vmatpush2.msra.mxu0 0.0
    %924 = vmatprep.subr.mxu0 0.0
    %925 = vmatpush2.msra.mxu0 0.0
    %926 = vmatprep.subr.mxu0 0.0
    %927 = vmatpush2.msra.mxu0 0.0
    %928 = vmatprep.subr.mxu0 0.0
    %929 = vmatpush2.msra.mxu0 0.0
    %930 = vmatprep.subr.mxu0 0.0
    %931 = vmatpush2.msra.mxu0 0.0
    %932 = vmatprep.subr.mxu0 0.0
    %933 = vmatpush2.msra.mxu0 0.0
    %934 = vmatprep.subr.mxu0 0.0
    %935 = vmatpush2.msra.mxu0 0.0
    %936 = vmatprep.subr.mxu0 0.0
    %937 = vmatpush2.msra.mxu0 0.0
    %938 = vmatprep.subr.mxu0 0.0
    %939 = vmatpush2.msra.mxu0 0.0
    %940 = vmatprep.subr.mxu0 0.0
    %941 = vmatpush2.msra.mxu0 0.0
    %942 = vmatprep.subr.mxu0 0.0
    %943 = vmatpush2.msra.mxu0 0.0
    %944 = vmatprep.mubr.f32.mxu0 0.0
    %945 = vmatmul.mubr.f32.gmra.mxu0 %v858
    %v946 = vpop.f32.mrf.mxu0
    %v947 = vadd.f32 %v879, %v946
    %v948 = vpop.f32.mrf.mxu0
    %949 = vdwg.mxu0
    %950 = vst [vmem:[%s4] sm:$0xff] %v947
    // Predicated region
    $region22: #{attention_critic_forward.1} parent=1 // pred_check
      _
    $region23: #{attention_critic_forward.1} parent=1 // pred_check_branch
      %952 = sbr.rel (0) target = $region25
    $region24: #{attention_critic_forward.1} parent=1 // pred_region
      _
    $region25: #{attention_critic_forward.1} parent=1 // pred_fallthru
      _
    // Predicated region
    $region26: #{attention_critic_forward.1} parent=1 // pred_check
      _
    $region27: #{attention_critic_forward.1} parent=1 // pred_check_branch
      %954 = sbr.rel (0) target = $region29
    $region28: #{attention_critic_forward.1} parent=1 // pred_region
      _
    $region29: #{attention_critic_forward.1} parent=1 // pred_fallthru
      _
    %955 = vsyncpa [#allocation3], 1

</llo_original>
